<compile_context>
chip_gen: v7x
topology: tpu7x:2x2x1
jax: 0.10.0
libtpu: 0.0.40
codegen_flags: <defaults>
</compile_context>

<pallas_src>
import functools

import numpy as np
import jax
import jax.numpy as jnp
from jax.experimental import pallas as pl
from jax.experimental.pallas import tpu as pltpu

_LANE = 128
_SUBLANE = 8


def _mix_tiled_kernel(idx_ref, lam_ref, xt_ref, xs_ref, out_ref):
    # idx_ref : SMEM int32[B]   (scalar prefetch; also drives x_t's index_map)
    # lam_ref : SMEM f32[1]     (mixing coefficient lam_t)
    # xt_ref  : VMEM (1, r_tile, 128) tile of x_t, gathered at row index_t[b]
    # xs_ref  : VMEM (1, r_tile, 128) tile of x_s at row b
    lam = lam_ref[0]
    xs = xs_ref[...].astype(jnp.float32)
    xt = xt_ref[...].astype(jnp.float32)
    out_ref[...] = (xs + lam * (xt - xs)).astype(out_ref.dtype)


def _mix_grouped_kernel(idx_ref, lam_ref, xt_hbm, xs_ref, out_ref, buf, sem):
    # idx_ref : SMEM int32[B]           (scalar prefetch)
    # lam_ref : SMEM f32[1]
    # xt_hbm  : full x_t (B, rows, 128) left in HBM (memory_space=pl.ANY)
    # xs_ref  : VMEM (G, rows, 128) block of x_s for this group of samples
    # out_ref : VMEM (G, rows, 128) output block
    # buf     : VMEM (G, rows, 128) scratch for the gathered x_t samples
    # sem     : DMA semaphores (G,)
    g = pl.program_id(0)
    G = buf.shape[0]
    # Gather the G permuted x_t samples of this group into VMEM.  The x_s
    # load / out store of adjacent grid steps are auto-pipelined by BlockSpec,
    # so HBM stays busy while these copies complete (kernel is HBM-bound).
    copies = [
        pltpu.make_async_copy(xt_hbm.at[idx_ref[g * G + i]], buf.at[i], sem.at[i])
        for i in range(G)
    ]
    for c in copies:
        c.start()
    for c in copies:
        c.wait()
    lam = lam_ref[0]
    xs = xs_ref[...].astype(jnp.float32)
    xt = buf[...].astype(jnp.float32)
    out_ref[...] = (xs + lam * (xt - xs)).astype(out_ref.dtype)


def _pick_group_size(batch, slab_bytes, target_tile_bytes, g_max=8):
    """Largest divisor of `batch` (<= g_max) whose group slab fits ~2x the tile
    budget and that still leaves >= 2 grid steps (v7x has 2 TensorCores)."""
    if slab_bytes <= 0 or batch <= 1:
        return 1
    cap = int(min(g_max, max(1, (2 * target_tile_bytes) // slab_bytes)))
    best = 1
    for g in range(2, min(batch, cap) + 1):
        if batch % g == 0 and batch // g >= 2:
            best = g
    return best


@functools.partial(jax.jit, static_argnames=("target_tile_bytes", "group_size"))
def mix_pallas(x_s, x_t, index_t, lam, target_tile_bytes=2 * 1024 * 1024,
               group_size=None):
    """mixed = lam * x_t[index_t] + (1 - lam) * x_s   for (B, ...) inputs."""
    B = x_s.shape[0]
    chw = int(np.prod(x_s.shape[1:]))
    itemsize = jnp.dtype(x_s.dtype).itemsize

    # Lane-dense view (B, rows, 128) at the *natural* row count; pad only the
    # lane remainder when chw isn't a multiple of 128.
    rows = -(-chw // _LANE)                                   # ceil(chw / 128)
    padded = rows * _LANE

    xs2 = x_s.reshape(B, chw)
    xt2 = x_t.reshape(B, chw)
    if padded != chw:
        xs2 = jnp.pad(xs2, ((0, 0), (0, padded - chw)))
        xt2 = jnp.pad(xt2, ((0, 0), (0, padded - chw)))
    xs3 = xs2.reshape(B, rows, _LANE)
    xt3 = xt2.reshape(B, rows, _LANE)

    lam_arr = jnp.asarray(lam, dtype=jnp.float32).reshape((1,))
    index_t = index_t.astype(jnp.int32)

    slab_bytes = rows * _LANE * itemsize          # one (lane-padded) sample

    if group_size is None:
        G = _pick_group_size(B, slab_bytes, target_tile_bytes)
    else:
        G = int(group_size)
        if G < 1 or B % G != 0:
            raise ValueError("group_size must be a positive divisor of batch")

    if G > 1:
        # ---- grouped path: G small samples per grid step (manual gather) ----
        num_groups = B // G
        group_bytes = G * slab_bytes
        # x_s: 2 pipeline bufs, out: 2, x_t gather scratch: 1  (+ headroom).
        vmem_limit = int(max(16 * 2**20, min(8 * group_bytes, 100 * 2**20)))
        out3 = pl.pallas_call(
            _mix_grouped_kernel,
            out_shape=jax.ShapeDtypeStruct((B, rows, _LANE), x_s.dtype),
            grid_spec=pltpu.PrefetchScalarGridSpec(
                num_scalar_prefetch=1,                        # index_t -> SMEM
                grid=(num_groups,),
                in_specs=[
                    pl.BlockSpec(memory_space=pltpu.MemorySpace.SMEM),  # lam
                    pl.BlockSpec(memory_space=pl.ANY),                  # x_t (HBM)
                    pl.BlockSpec((G, rows, _LANE), lambda g, idx: (g, 0, 0)),
                ],
                out_specs=pl.BlockSpec((G, rows, _LANE), lambda g, idx: (g, 0, 0)),
                scratch_shapes=[pltpu.VMEM((G, rows, _LANE), x_s.dtype),
                                pltpu.SemaphoreType.DMA((G,))],
            ),
            compiler_params=pltpu.CompilerParams(
                dimension_semantics=("parallel",),
                vmem_limit_bytes=vmem_limit),
        )(index_t, lam_arr, xt3, xs3)
    else:
        # ---- tiled per-sample path (large samples or indivisible batch) ----
        max_rows = max(_SUBLANE,
                       (target_tile_bytes // (_LANE * itemsize))
                       // _SUBLANE * _SUBLANE)
        if rows <= max_rows:
            r_tile, n_tiles = rows, 1          # block == full row extent
        else:
            r_tile = max_rows                  # multiple of 8; last block masked
            n_tiles = -(-rows // r_tile)
        tile_bytes = r_tile * _LANE * itemsize
        # 3 arrays x 2 pipeline buffers per tile; default 2 MiB tile -> ~24 MiB,
        # safely inside v7x's 64 MiB per-TC VMEM.
        vmem_limit = int(max(16 * 2**20, min(12 * tile_bytes, 100 * 2**20)))
        out3 = pl.pallas_call(
            _mix_tiled_kernel,
            out_shape=jax.ShapeDtypeStruct((B, rows, _LANE), x_s.dtype),
            grid_spec=pltpu.PrefetchScalarGridSpec(
                num_scalar_prefetch=1,                        # index_t -> SMEM
                grid=(B, n_tiles),
                in_specs=[
                    pl.BlockSpec(memory_space=pltpu.MemorySpace.SMEM),  # lam
                    # x_t gathered by the permutation (data-dependent index_map)
                    pl.BlockSpec((1, r_tile, _LANE),
                                 lambda b, t, idx: (idx[b], t, 0)),
                    # x_s in natural batch order
                    pl.BlockSpec((1, r_tile, _LANE),
                                 lambda b, t, idx: (b, t, 0)),
                ],
                out_specs=pl.BlockSpec((1, r_tile, _LANE),
                                       lambda b, t, idx: (b, t, 0)),
            ),
            compiler_params=pltpu.CompilerParams(
                dimension_semantics=("parallel", "parallel"),
                vmem_limit_bytes=vmem_limit),
        )(index_t, lam_arr, xt3, xs3)

    out2 = out3.reshape(B, padded)
    if padded != chw:
        out2 = out2[:, :chw]
    return out2.reshape(x_s.shape)


class DataGenerator:
    """JAX/Pallas port of the PyTorch DataGenerator (stateful coeff schedule)."""

    def __init__(self, alpha=1.0, lo=0.0, hi=1.0, max_iters=1000.0,
                 auto_step=True, sup=10.0):
        self.alpha = alpha
        self.lo = lo
        self.hi = hi
        self.iter_num = 0
        self.max_iters = max_iters
        self.auto_step = auto_step
        self.coeff = 0
        self.sup = sup

    def step(self):
        self.iter_num += 1

    def forward(self, x_s, x_t, y_s, y_t, key, get_x_t=False):
        coeff = self.sup * np.float64(
            2.0 * (self.hi - self.lo)
            / (1.0 + np.exp(-self.alpha * self.iter_num / self.max_iters))
            - (self.hi - self.lo) + self.lo)
        self.coeff = coeff
        if self.auto_step:
            self.step()

        a, b = float(coeff), float(self.sup - coeff)
        key_lam, key_perm = jax.random.split(key)
        if a > 0 and b > 0:
            # np.random.beta in the original -> deterministic on-device sample.
            lam_t = jax.random.beta(key_lam, a, b, dtype=jnp.float32)
        else:
            lam_t = jnp.float32(1.0)

        batch_size = x_s.shape[0]
        # torch.randperm -> deterministic jax.random.permutation
        index_t = jax.random.permutation(key_perm, batch_size).astype(jnp.int32)

        mixed_x = mix_pallas(x_s, x_t, index_t, lam_t)
        y_a = jnp.take(y_t, index_t, axis=0)
        y_b = y_s
        return mixed_x, y_a, y_b, lam_t


if __name__ == "__main__":
    key = jax.random.PRNGKey(0)
    k1, k2, k3, k4, k5, k6, k7, k8 = jax.random.split(key, 8)

    B, C, H, W = 2, 4, 16, 16
    x_s = jax.random.normal(k1, (B, C, H, W), jnp.float32)
    x_t = jax.random.normal(k2, (B, C, H, W), jnp.float32)
    y_s = jax.random.randint(k3, (B,), 0, 10, dtype=jnp.int32)
    y_t = jax.random.randint(k4, (B,), 0, 10, dtype=jnp.int32)

    gen = DataGenerator()

    # First call: iter_num=0 -> coeff=0 -> lam_t=1 branch (mixed_x = x_t[index_t]).
    mixed_x, y_a, y_b, lam_t = gen.forward(x_s, x_t, y_s, y_t, k5)
    jax.block_until_ready(mixed_x)

    # Second call: coeff > 0 after auto_step -> Beta(a, sup-a) branch.
    mixed_x2, y_a2, y_b2, lam_t2 = gen.forward(x_s, x_t, y_s, y_t, k6)
    jax.block_until_ready(mixed_x2)

    # Tiled per-sample path vs. plain-JAX reference (lane-aligned, no padding).
    idx_fix = jnp.array([1, 0], dtype=jnp.int32)
    lam_fix = 0.37
    got = mix_pallas(x_s, x_t, idx_fix, lam_fix)
    want = lam_fix * jnp.take(x_t, idx_fix, axis=0) + (1.0 - lam_fix) * x_s
    np.testing.assert_allclose(np.asarray(got), np.asarray(want),
                               rtol=1e-6, atol=1e-6)

    # Lane-padded tiled path (chw % 128 != 0, natural rows=3 kept).
    xs_odd = jax.random.normal(k5, (B, 3, 10, 10), jnp.float32)
    xt_odd = jax.random.normal(k6, (B, 3, 10, 10), jnp.float32)
    got2 = mix_pallas(xs_odd, xt_odd, idx_fix, lam_fix)
    want2 = lam_fix * jnp.take(xt_odd, idx_fix, axis=0) + (1.0 - lam_fix) * xs_odd
    np.testing.assert_allclose(np.asarray(got2), np.asarray(want2),
                               rtol=1e-6, atol=1e-6)

    # Grouped path (G samples per grid step, manual gather DMA), lane-aligned.
    Bg = 8
    xs_g = jax.random.normal(k7, (Bg, C, H, W), jnp.float32)
    xt_g = jax.random.normal(k8, (Bg, C, H, W), jnp.float32)
    idx_g = jax.random.permutation(k7, Bg).astype(jnp.int32)
    got3 = mix_pallas(xs_g, xt_g, idx_g, lam_fix)      # auto-picks G=4, 2 groups
    want3 = lam_fix * jnp.take(xt_g, idx_g, axis=0) + (1.0 - lam_fix) * xs_g
    np.testing.assert_allclose(np.asarray(got3), np.asarray(want3),
                               rtol=1e-6, atol=1e-6)

    # Grouped path with a lane-padded, non-8-multiple row count.
    xs_go = jax.random.normal(k7, (Bg, 3, 10, 10), jnp.float32)
    xt_go = jax.random.normal(k8, (Bg, 3, 10, 10), jnp.float32)
    got4 = mix_pallas(xs_go, xt_go, idx_g, lam_fix, group_size=4)
    want4 = lam_fix * jnp.take(xt_go, idx_g, axis=0) + (1.0 - lam_fix) * xs_go
    np.testing.assert_allclose(np.asarray(got4), np.asarray(want4),
                               rtol=1e-6, atol=1e-6)

    assert mixed_x.shape == (B, C, H, W)
    assert y_a.shape == (B,) and y_b.shape == (B,)
    print("KERNEL_OK")
</pallas_src>

<mosaic_0001>
module attributes {stable_mosaic.version = 11 : i64} {
  func.func @_mix_tiled_kernel(%arg0: i32, %arg1: i32, %arg2: memref<2xi32, #tpu.memory_space<smem>>, %arg3: memref<1xf32, #tpu.memory_space<smem>>, %arg4: memref<1x8x128xf32, #tpu.memory_space<vmem>>, %arg5: memref<1x8x128xf32, #tpu.memory_space<vmem>>, %arg6: memref<1x8x128xf32, #tpu.memory_space<vmem>>) attributes {dimension_semantics = [#tpu.dimension_semantics<parallel>, #tpu.dimension_semantics<parallel>], iteration_bounds = array<i64: 2, 1>, scalar_prefetch = 1 : i64, scratch_operands = 0 : i64, tpu.core_type = #tpu.core_type<tc>, window_params = [{transform_indices = @transform_0, window_bounds = array<i64: 1>}, {transform_indices = @transform_1, window_bounds = array<i64: 1, 8, 128>}, {transform_indices = @transform_2, window_bounds = array<i64: 1, 8, 128>}, {transform_indices = @transform_3, window_bounds = array<i64: 1, 8, 128>}]} {
    %c0 = arith.constant 0 : index
    %0 = memref.load %arg3[%c0] : memref<1xf32, #tpu.memory_space<smem>>
    %c0_0 = arith.constant 0 : index
    %c0_1 = arith.constant 0 : index
    %c0_2 = arith.constant 0 : index
    %1 = vector.load %arg5[%c0_0, %c0_1, %c0_2] : memref<1x8x128xf32, #tpu.memory_space<vmem>>, vector<1x8x128xf32>
    %c0_3 = arith.constant 0 : index
    %c0_4 = arith.constant 0 : index
    %c0_5 = arith.constant 0 : index
    %2 = vector.load %arg4[%c0_3, %c0_4, %c0_5] : memref<1x8x128xf32, #tpu.memory_space<vmem>>, vector<1x8x128xf32>
    %3 = arith.subf %2, %1 : vector<1x8x128xf32>
    %4 = vector.broadcast %0 : f32 to vector<1x8x128xf32>
    %5 = arith.mulf %4, %3 : vector<1x8x128xf32>
    %6 = arith.addf %1, %5 : vector<1x8x128xf32>
    %c0_6 = arith.constant 0 : index
    %c0_7 = arith.constant 0 : index
    %c0_8 = arith.constant 0 : index
    %7 = vector.load %arg6[%c0_6, %c0_7, %c0_8] : memref<1x8x128xf32, #tpu.memory_space<vmem>>, vector<1x8x128xf32>
    tpu.vector_store %arg6[%c0_6, %c0_7, %c0_8], %6 {strides = array<i32>} : memref<1x8x128xf32, #tpu.memory_space<vmem>>, vector<1x8x128xf32>,
    return
  }
  func.func @transform_0(%arg0: i32, %arg1: i32, %arg2: memref<2xi32, #tpu.memory_space<smem>>) -> i32 {
    %c0_i32 = arith.constant 0 : i32
    %c0_i32_0 = arith.constant 0 : i32
    return %c0_i32 : i32
  }
  func.func @transform_1(%arg0: i32, %arg1: i32, %arg2: memref<2xi32, #tpu.memory_space<smem>>) -> (i32, i32, i32) {
    %0 = arith.index_cast %arg0 : i32 to index
    %1 = memref.load %arg2[%0] : memref<2xi32, #tpu.memory_space<smem>>
    %c0_i32 = arith.constant 0 : i32
    %c0_i32_0 = arith.constant 0 : i32
    return %1, %arg1, %c0_i32 : i32, i32, i32
  }
  func.func @transform_2(%arg0: i32, %arg1: i32, %arg2: memref<2xi32, #tpu.memory_space<smem>>) -> (i32, i32, i32) {
    %c0_i32 = arith.constant 0 : i32
    %c0_i32_0 = arith.constant 0 : i32
    return %arg0, %arg1, %c0_i32 : i32, i32, i32
  }
  func.func @transform_3(%arg0: i32, %arg1: i32, %arg2: memref<2xi32, #tpu.memory_space<smem>>) -> (i32, i32, i32) {
    %c0_i32 = arith.constant 0 : i32
    %c0_i32_0 = arith.constant 0 : i32
    return %arg0, %arg1, %c0_i32 : i32, i32, i32
  }
}

</mosaic_0001>

<llo_original>
// kernel: mix_pallas.1
$region0: #{mix_pallas.1}
  #allocation0 [shape = 'u32[]', space=smem, size = 0x4, offset = 0x4, fixed_abs, tag = 'smem constant byte address 0x4 - core index']
  #allocation1 [shape = 'u32[144,128]{1,0:T(1,128)}', space=vmem, size = 0x12000, scoped, tag = 'internal scratch']
  #allocation2 [shape = 's32[1]{0}', space=sflag, size = 0x4, scoped, tag = 'scoped memory for mix_pallas.1']
  #allocation3 [shape = 'u8[512]{0}', space=smem, size = 0x200, scoped, tag = 'prefetched SMEM operand 0']
  #allocation4 [shape = 'f32[1]{0:T(128)S(6)}', space=smem, size = 0x200, scoped, tag = 'scoped memory for mix_pallas.1']
  %s0 = inlined_call_operand.vmem [shape: s32[2], index: 0, kind: input, shape index: {}]
  %s1 = inlined_call_operand.<no memory space> [shape: f32[1], index: 1, kind: input, shape index: {}]
  %s2 = inlined_call_operand.vmem [shape: f32[2,8,128], index: 2, kind: input, shape index: {}]
  %s3 = inlined_call_operand.vmem [shape: f32[2,8,128], index: 3, kind: input, shape index: {}]
  %s4 = inlined_call_operand.vmem [shape: f32[2,8,128], index: 4, kind: output, shape index: {}]
  %s5 = sld [smem:[#allocation0]]
  $region45: #{mix_pallas.1} parent=0
    _
  %s7 = ssub.s32 1, %s5
  %s8 = scalar_select 0, %s7, %s5
  %s9 = sshll.u32 %s0, 4
  %s10 = int_to_ptr.vmem [resolvable:$true] %s9
  %12 = dma.vmem_to_smem %s10, 16, [#allocation3], [#allocation2]
  %13 = sst [smem:[#allocation4]] %s1
  %14 = dma.done [#allocation2], 16
  %15 = sfence
  loop: start=0, step=1, limit=4
  $region2: #{mix_pallas.1} parent=0 // loop_pre_header
    _
  $region3: #{mix_pallas.1} parent=0 // loop_header
    %s17 = sphi 0, %s21
    %p18 = scmp.ge.s32.totalorder %s17, 4
    %s24 = sphi 0, %s36
    %s25 = sphi 0, %s32
    %s26 = sphi 0, %s24
    %s27 = sphi 0, %s25
    %s28 = sphi 0, %s26
    %s29 = sphi 0, %s27
    %s37 = sphi 0, %s37
    %s39 = sphi 0, %s37
    %s40 = sphi 0, %s39
    %s54 = sphi 0, %s40
    %s64 = sphi 0, %s66
    %s67 = sphi 0, %s64
    %s68 = sphi 0, %s67
    %s84 = sphi 0, %s68
    %s92 = sphi 0, %s94
    %s95 = sphi 0, %s92
    %s96 = sphi 0, %s95
    %s112 = sphi 0, %s96
    %s120 = sphi 0, %s122
    %s123 = sphi 0, %s120
    %s124 = sphi 0, %s123
    %s140 = sphi 0, %s124
  $region4: #{mix_pallas.1} parent=0 // loop_header_branch
    %20 = sbr.rel (%p18) target = $region8
  $region5: #{mix_pallas.1} parent=0 // loop_body
    %s22 = ssub.s32 %s17, 1
    %s23 = ssub.s32 %s17, 2
    %s30 = sadd.s32 1, %s25
    %p31 = scmp.ge.s32.totalorder %s30, 1
    %s32 = scalar_select %p31, 0, %s30
    %s33 = sadd.s32 1, %s24
    %s34 = scalar_select %p31, %s33, %s24
    %p35 = scmp.ge.s32.totalorder %s34, 2
    %s36 = scalar_select %p35, 0, %s34
    %s38 = sadd.s32 %s37, 1
    %p41 = scmp.eq.s32.totalorder %s17, 1
    %p42 = scmp.ne.s32.totalorder %s37, %s39
    %p43 = scmp.eq.s32.totalorder %s17, 0
    %p44 = por %p42, %p43
    %p45 = scmp.ne.s32.totalorder %s37, %s39
    %p46 = scmp.eq.s32.totalorder %s22, 1
    %p47 = por %p45, %p46
    %p48 = scmp.ne.s32.totalorder %s39, %s40
    %p49 = scmp.eq.s32.totalorder %s22, 0
    %p50 = por %p48, %p49
    %p51 = scmp.ne.s32.totalorder %s39, %s40
    %p52 = scmp.eq.s32.totalorder %s23, 1
    %p53 = por %p51, %p52
    %p55 = scmp.ne.s32.totalorder %s40, %s54
    %p56 = scmp.eq.s32.totalorder %s23, 0
    %p57 = por %p55, %p56
    %s58 = sld [smem:[#allocation3 + %s24]]
    %s59 = sld [smem:[#allocation3 + %s36]]
    %s60 = ssub.s32 %s58, %s59
    %s61 = ssub.s32 %s25, %s32
    %s62 = sor.u32 %s60, %s61
    %p63 = scmp.eq.s32.totalorder %s62, 0
    %s65 = sadd.s32 %s64, 1
    %s66 = scalar_select %p63, %s64, %s65
    %p69 = pneg %p63
    %p70 = scmp.eq.s32.totalorder %s17, 1
    %p71 = por %p69, %p70
    %p72 = scmp.ne.s32.totalorder %s64, %s67
    %p73 = scmp.eq.s32.totalorder %s17, 0
    %p74 = por %p72, %p73
    %p75 = scmp.ne.s32.totalorder %s64, %s67
    %p76 = scmp.eq.s32.totalorder %s22, 1
    %p77 = por %p75, %p76
    %p78 = scmp.ne.s32.totalorder %s67, %s68
    %p79 = scmp.eq.s32.totalorder %s22, 0
    %p80 = por %p78, %p79
    %p81 = scmp.ne.s32.totalorder %s67, %s68
    %p82 = scmp.eq.s32.totalorder %s23, 1
    %p83 = por %p81, %p82
    %p85 = scmp.ne.s32.totalorder %s68, %s84
    %p86 = scmp.eq.s32.totalorder %s23, 0
    %p87 = por %p85, %p86
    %s88 = ssub.s32 %s24, %s36
    %s89 = ssub.s32 %s25, %s32
    %s90 = sor.u32 %s88, %s89
    %p91 = scmp.eq.s32.totalorder %s90, 0
    %s93 = sadd.s32 %s92, 1
    %s94 = scalar_select %p91, %s92, %s93
    %p97 = pneg %p91
    %p98 = scmp.eq.s32.totalorder %s17, 1
    %p99 = por %p97, %p98
    %p100 = scmp.ne.s32.totalorder %s92, %s95
    %p101 = scmp.eq.s32.totalorder %s17, 0
    %p102 = por %p100, %p101
    %p103 = scmp.ne.s32.totalorder %s92, %s95
    %p104 = scmp.eq.s32.totalorder %s22, 1
    %p105 = por %p103, %p104
    %p106 = scmp.ne.s32.totalorder %s95, %s96
    %p107 = scmp.eq.s32.totalorder %s22, 0
    %p108 = por %p106, %p107
    %p109 = scmp.ne.s32.totalorder %s95, %s96
    %p110 = scmp.eq.s32.totalorder %s23, 1
    %p111 = por %p109, %p110
    %p113 = scmp.ne.s32.totalorder %s96, %s112
    %p114 = scmp.eq.s32.totalorder %s23, 0
    %p115 = por %p113, %p114
    %s116 = ssub.s32 %s24, %s36
    %s117 = ssub.s32 %s25, %s32
    %s118 = sor.u32 %s116, %s117
    %p119 = scmp.eq.s32.totalorder %s118, 0
    %s121 = sadd.s32 %s120, 1
    %s122 = scalar_select %p119, %s120, %s121
    %p125 = pneg %p119
    %p126 = scmp.eq.s32.totalorder %s17, 1
    %p127 = por %p125, %p126
    %p128 = scmp.ne.s32.totalorder %s120, %s123
    %p129 = scmp.eq.s32.totalorder %s17, 0
    %p130 = por %p128, %p129
    %p131 = scmp.ne.s32.totalorder %s120, %s123
    %p132 = scmp.eq.s32.totalorder %s22, 1
    %p133 = por %p131, %p132
    %p134 = scmp.ne.s32.totalorder %s123, %s124
    %p135 = scmp.eq.s32.totalorder %s22, 0
    %p136 = por %p134, %p135
    %p137 = scmp.ne.s32.totalorder %s123, %s124
    %p138 = scmp.eq.s32.totalorder %s23, 1
    %p139 = por %p137, %p138
    %p141 = scmp.ne.s32.totalorder %s124, %s140
    %p142 = scmp.eq.s32.totalorder %s23, 0
    %p143 = por %p141, %p142
    %p144 = scmp.le.s32.totalorder 1, %s17
    %p145 = scmp.lt.s32.totalorder %s17, 3
    %p146 = pnand %p144, %p145
    %p147 = pneg %p146
    // Predicated region
    $region9: #{mix_pallas.1} parent=5 // pred_check
      _
    $region10: #{mix_pallas.1} parent=5 // pred_check_branch
      %149 = sbr.rel (%p146) target = $region12
    $region11: #{mix_pallas.1} parent=5 // pred_region
      %s150 = ssub.s32 %s17, 1
      // Predicated region
      $region13: #{mix_pallas.1} parent=11 // pred_check
        %p151 = pneg %p50
      $region14: #{mix_pallas.1} parent=11 // pred_check_branch
        %153 = sbr.rel (%p151) target = $region16
      $region15: #{mix_pallas.1} parent=11 // pred_region
        _
      $region16: #{mix_pallas.1} parent=11 // pred_fallthru
        _
    $region12: #{mix_pallas.1} parent=5 // pred_fallthru
      _
    %p154 = scmp.lt.s32.totalorder %s17, 2
    // Predicated region
    $region17: #{mix_pallas.1} parent=5 // pred_check
      %p155 = pneg %p154
    $region18: #{mix_pallas.1} parent=5 // pred_check_branch
      %157 = sbr.rel (%p155) target = $region20
    $region19: #{mix_pallas.1} parent=5 // pred_region
      // Predicated region
      $region21: #{mix_pallas.1} parent=19 // pred_check
        %p158 = pneg %p74
      $region22: #{mix_pallas.1} parent=19 // pred_check_branch
        %160 = sbr.rel (%p158) target = $region24
      $region23: #{mix_pallas.1} parent=19 // pred_region
        %s161 = sld [smem:[#allocation3 + %s24]]
        %p162 = scmp.lt.s32.totalorder %s161, 1
        %s163 = scalar_select %p162, %s161, 1
        %p164 = scmp.lt.s32.totalorder %s25, 0
        %s165 = scalar_select %p164, %s25, 0
        %s166 = sadd.s32 %s165, %s163
        %s167 = smul.addr %s166, 8
        %s168 = scalar_lea.vmem %s2, %s167
        %s169 = sld [smem:[#allocation3 + %s24]]
      $region24: #{mix_pallas.1} parent=19 // pred_fallthru
        _
      // Predicated region
      $region25: #{mix_pallas.1} parent=19 // pred_check
        %p170 = pneg %p102
      $region26: #{mix_pallas.1} parent=19 // pred_check_branch
        %172 = sbr.rel (%p170) target = $region28
      $region27: #{mix_pallas.1} parent=19 // pred_region
        %p173 = scmp.lt.s32.totalorder %s24, 1
        %s174 = scalar_select %p173, %s24, 1
        %p175 = scmp.lt.s32.totalorder %s25, 0
        %s176 = scalar_select %p175, %s25, 0
        %s177 = sadd.s32 %s176, %s174
        %s178 = smul.addr %s177, 8
        %s179 = scalar_lea.vmem %s3, %s178
      $region28: #{mix_pallas.1} parent=19 // pred_fallthru
        _
    $region20: #{mix_pallas.1} parent=5 // pred_fallthru
      _
    %p180 = scmp.le.s32.totalorder 1, %s17
    %p181 = scmp.lt.s32.totalorder %s17, 3
    %p182 = pnand %p180, %p181
    %p183 = pneg %p182
    // Predicated region
    $region29: #{mix_pallas.1} parent=5 // pred_check
      _
    $region30: #{mix_pallas.1} parent=5 // pred_check_branch
      %185 = sbr.rel (%p182) target = $region32
    $region31: #{mix_pallas.1} parent=5 // pred_region
      %s186 = ssub.s32 %s17, 1
      %p187 = pneg %p50
      %p188 = pneg %p47
      %s189 = sld [smem:[#allocation3 + %s26]]
      %p190 = scmp.lt.s32.totalorder %s189, 1
      %s191 = scalar_select %p190, %s189, 1
      %p192 = scmp.lt.s32.totalorder %s27, 0
      %s193 = scalar_select %p192, %s27, 0
      %s194 = sadd.s32 %s193, %s191
      %s195 = smul.addr %s194, 8
      %s196 = scalar_lea.vmem %s2, %s195
      %p197 = pneg %p80
      %p198 = pneg %p77
      %p199 = scmp.lt.s32.totalorder %s26, 1
      %s200 = scalar_select %p199, %s26, 1
      %p201 = scmp.lt.s32.totalorder %s27, 0
      %s202 = scalar_select %p201, %s27, 0
      %s203 = sadd.s32 %s202, %s200
      %s204 = smul.addr %s203, 8
      %s205 = scalar_lea.vmem %s3, %s204
      %p206 = pneg %p108
      %p207 = pneg %p105
      %p208 = pneg %p136
      %p209 = pneg %p133
      %p210 = scmp.lt.s32.totalorder %s26, 1
      %s211 = scalar_select %p210, %s26, 1
      %p212 = scmp.lt.s32.totalorder %s27, 0
      %s213 = scalar_select %p212, %s27, 0
      %s214 = sadd.s32 %s213, %s211
      %s215 = smul.addr %s214, 8
      %s216 = scalar_lea.vmem %s4, %s215
      %s217 = sld [smem:[#allocation3 + %s26]]
      %p218 = scmp.lt.s32.totalorder %s217, 1
      %s219 = scalar_select %p218, %s217, 1
      %p220 = scmp.lt.s32.totalorder %s27, 0
      %s221 = scalar_select %p220, %s27, 0
      %s222 = sadd.s32 %s221, %s219
      %s223 = smul.addr %s222, 8
      %s224 = scalar_lea.vmem %s2, %s223
      %s225 = sld [smem:[#allocation3 + %s26]]
      %p226 = scmp.lt.s32.totalorder %s26, 1
      %s227 = scalar_select %p226, %s26, 1
      %p228 = scmp.lt.s32.totalorder %s27, 0
      %s229 = scalar_select %p228, %s27, 0
      %s230 = sadd.s32 %s229, %s227
      %s231 = smul.addr %s230, 8
      %s232 = scalar_lea.vmem %s3, %s231
      %p233 = scmp.lt.s32.totalorder %s26, 1
      %s234 = scalar_select %p233, %s26, 1
      %p235 = scmp.lt.s32.totalorder %s27, 0
      %s236 = scalar_select %p235, %s27, 0
      %s237 = sadd.s32 %s236, %s234
      %s238 = smul.addr %s237, 8
      %s239 = scalar_lea.vmem %s4, %s238
      %s240 = sld [smem:[#allocation4]]
      %v241 = vld [vmem:[%s232] sm:$0xff]
      %v242 = vld [vmem:[%s224] sm:$0xff]
      %v243 = vsub.f32 %v242, %v241
      %v244 = vstv %s240
      %v245 = vmul.f32 %v244, %v243
      %v246 = vadd.f32 %v241, %v245
      %247 = vst [vmem:[%s239] sm:$0xff] %v246
      %p248 = scmp.lt.s32.totalorder %s26, 1
      %s249 = scalar_select %p248, %s26, 1
      %p250 = scmp.lt.s32.totalorder %s27, 0
      %s251 = scalar_select %p250, %s27, 0
      %s252 = sadd.s32 %s251, %s249
      %s253 = smul.addr %s252, 8
      %s254 = scalar_lea.vmem %s4, %s253
      // Predicated region
      $region33: #{mix_pallas.1} parent=31 // pred_check
        %p255 = pneg %p133
      $region34: #{mix_pallas.1} parent=31 // pred_check_branch
        %257 = sbr.rel (%p255) target = $region36
      $region35: #{mix_pallas.1} parent=31 // pred_region
        _
      $region36: #{mix_pallas.1} parent=31 // pred_fallthru
        _
    $region32: #{mix_pallas.1} parent=5 // pred_fallthru
      _
    %p258 = scmp.le.s32.totalorder 2, %s17
    // Predicated region
    $region37: #{mix_pallas.1} parent=5 // pred_check
      %p259 = pneg %p258
    $region38: #{mix_pallas.1} parent=5 // pred_check_branch
      %261 = sbr.rel (%p259) target = $region40
    $region39: #{mix_pallas.1} parent=5 // pred_region
      %s262 = ssub.s32 %s17, 2
      // Predicated region
      $region41: #{mix_pallas.1} parent=39 // pred_check
        %p263 = pneg %p139
      $region42: #{mix_pallas.1} parent=39 // pred_check_branch
        %265 = sbr.rel (%p263) target = $region44
      $region43: #{mix_pallas.1} parent=39 // pred_region
        %p266 = scmp.lt.s32.totalorder %s28, 1
        %s267 = scalar_select %p266, %s28, 1
        %p268 = scmp.lt.s32.totalorder %s29, 0
        %s269 = scalar_select %p268, %s29, 0
        %s270 = sadd.s32 %s269, %s267
        %s271 = smul.addr %s270, 8
        %s272 = scalar_lea.vmem %s4, %s271
      $region44: #{mix_pallas.1} parent=39 // pred_fallthru
        _
    $region40: #{mix_pallas.1} parent=5 // pred_fallthru
      _
  $region6: #{mix_pallas.1} parent=0 // loop_footer
    %s21 = sadd.s32 1, %s17
  $region7: #{mix_pallas.1} parent=0 // loop_footer_branch
    %16 = sbr.rel target = $region3
  $region8: #{mix_pallas.1} parent=0 // loop_exit
    _

</llo_original>
